<compile_context>
chip_gen: v7x
topology: tpu7x:2x2x1
jax: 0.10.0
libtpu: 0.0.40
codegen_flags: <defaults>
</compile_context>

<pallas_src>
import functools
import math

import jax
import jax.numpy as jnp
from jax import lax
from jax.experimental import pallas as pl
from jax.experimental.pallas import tpu as pltpu

_HIDDEN = 256  # hidden width of each head's first Linear (fixed by the PyTorch module)


def _softplus(x, threshold):
    # PyTorch nn.Softplus(beta=1, threshold=t): x if x > t else log(1 + exp(x))
    safe = jnp.minimum(x, threshold)  # keep the exp branch overflow-free
    return jnp.where(x > threshold, x, jnp.log1p(jnp.exp(safe)))


def _round_up(n, m):
    return ((n + m - 1) // m) * m


def _mdn_fused_kernel(G, GO, x_ref, w1_ref, b1_ref, w2_ref, b2_ref, out_ref):
    # ---- fused first layer: one wide (D, 768) matmul + one bias add + one ReLU
    x = x_ref[...].astype(w1_ref.dtype)
    h = jnp.dot(x, w1_ref[...], preferred_element_type=jnp.float32) + b1_ref[...]
    h = jnp.maximum(h, 0.0)

    # ---- fused second layer: block-diagonal (768, P) matmul -> lane-dense (TB, P) slab
    z = jnp.dot(h.astype(w2_ref.dtype), w2_ref[...],
                preferred_element_type=jnp.float32) + b2_ref[...]

    TB, P = z.shape
    col = lax.broadcasted_iota(jnp.int32, (TB, P), 1)
    is_pi = col < G

    # softmax restricted to the pi columns (1/temperature already folded into w2/b2)
    logits = jnp.where(is_pi, z, -jnp.inf)
    m = jnp.max(logits, axis=1, keepdims=True)      # finite: at least one pi column exists
    e = jnp.exp(logits - m)                          # non-pi columns -> exp(-inf) = 0
    pi_v = e / jnp.sum(e, axis=1, keepdims=True)

    sp_sigma = _softplus(z, 20.0)   # nn.Softplus() default threshold
    sp_mu = _softplus(z, 0.5)       # nn.Softplus(threshold=0.5)

    out = jnp.where(is_pi, pi_v,
          jnp.where(col < G + GO, sp_sigma,
          jnp.where(col < G + 2 * GO, sp_mu, 0.0)))
    out_ref[...] = out


def pack_mdn_params(params, num_gaussians, out_features, temperature=1.0, use_bf16=True):
    """Fuse the three heads: wide W1/b1 and block-diagonal lane-padded W2/b2.

    Folds 1/temperature into the pi columns of W2/b2.
    """
    G, O = num_gaussians, out_features
    GO = G * O
    H = params["pi"]["w1"].shape[1]
    inv_t = jnp.float32(1.0 / float(temperature))

    w1 = jnp.concatenate(
        [params["pi"]["w1"], params["sigma"]["w1"], params["mu"]["w1"]], axis=1)   # (D, 3H)
    b1 = jnp.concatenate(
        [params["pi"]["b1"], params["sigma"]["b1"], params["mu"]["b1"]], axis=1)   # (1, 3H)

    P = _round_up(G + 2 * GO, 128)  # lane-dense output width (>= 1 full vreg lane group)

    w2 = jnp.zeros((3 * H, P), jnp.float32)
    w2 = w2.at[0 * H:1 * H, 0:G].set(params["pi"]["w2"] * inv_t)
    w2 = w2.at[1 * H:2 * H, G:G + GO].set(params["sigma"]["w2"])
    w2 = w2.at[2 * H:3 * H, G + GO:G + 2 * GO].set(params["mu"]["w2"])

    b2 = jnp.zeros((1, P), jnp.float32)
    b2 = b2.at[:, 0:G].set(params["pi"]["b2"] * inv_t)
    b2 = b2.at[:, G:G + GO].set(params["sigma"]["b2"])
    b2 = b2.at[:, G + GO:G + 2 * GO].set(params["mu"]["b2"])

    if use_bf16:
        w1 = w1.astype(jnp.bfloat16)
        w2 = w2.astype(jnp.bfloat16)
    # biases stay f32 (added after f32-accumulated matmul)
    return {"w1": w1, "b1": b1, "w2": w2, "b2": b2, "pad_cols": P}


def mdn_forward(x, packed, num_gaussians, out_features, tile_b=128):
    """x: (B, D) float32.  Returns (pi (B,G), sigma (B,G,O), mu (B,G,O))."""
    B, D = x.shape
    G, O = num_gaussians, out_features
    GO = G * O
    P = packed["pad_cols"]
    H3 = packed["w1"].shape[1]

    # Batch tile: multiple of 8 sublanes; cap at tile_b (128 works on all generations,
    # 256 is also fine on v6e/v7x for larger batches).
    TB = min(tile_b, _round_up(B, 8))
    B_pad = _round_up(B, TB)
    if B_pad != B:
        x = jnp.pad(x, ((0, B_pad - B), (0, 0)))

    kernel = functools.partial(_mdn_fused_kernel, G, GO)

    out = pl.pallas_call(
        kernel,
        out_shape=jax.ShapeDtypeStruct((B_pad, P), jnp.float32),
        grid=(B_pad // TB,),
        in_specs=[
            pl.BlockSpec((TB, D), lambda i: (i, 0)),    # x: tiled along batch
            pl.BlockSpec((D, H3), lambda i: (0, 0)),    # W1cat: resident
            pl.BlockSpec((1, H3), lambda i: (0, 0)),    # b1cat: resident
            pl.BlockSpec((H3, P), lambda i: (0, 0)),    # W2cat: resident
            pl.BlockSpec((1, P), lambda i: (0, 0)),     # b2cat: resident
        ],
        out_specs=pl.BlockSpec((TB, P), lambda i: (i, 0)),
        compiler_params=pltpu.CompilerParams(
            dimension_semantics=("parallel",),          # megacore split on v7x
        ),
    )(x, packed["w1"], packed["b1"], packed["w2"], packed["b2"])

    out = out[:B]
    pi = out[:, :G]
    sigma = out[:, G:G + GO].reshape(B, G, O)   # matches .view(-1, num_gaussians, out_features)
    mu = out[:, G + GO:G + 2 * GO].reshape(B, G, O)
    return pi, sigma, mu


def init_mdn_params(key, in_features, out_features, num_gaussians, hidden=_HIDDEN):
    """Deterministic PyTorch-style (uniform +/- 1/sqrt(fan_in)) init."""
    def init_linear(k, fan_in, fan_out):
        kw, kb = jax.random.split(k)
        bound = 1.0 / math.sqrt(fan_in)
        w = jax.random.uniform(kw, (fan_in, fan_out), jnp.float32, -bound, bound)
        b = jax.random.uniform(kb, (1, fan_out), jnp.float32, -bound, bound)
        return w, b

    keys = jax.random.split(key, 6)
    params = {}
    for name, k1, k2, out_dim in (
        ("pi", keys[0], keys[1], num_gaussians),
        ("sigma", keys[2], keys[3], num_gaussians * out_features),
        ("mu", keys[4], keys[5], num_gaussians * out_features),
    ):
        w1, b1 = init_linear(k1, in_features, hidden)
        w2, b2 = init_linear(k2, hidden, out_dim)
        params[name] = {"w1": w1, "b1": b1, "w2": w2, "b2": b2}
    return params


def mdn_reference(x, params, num_gaussians, out_features, temperature=1.0):
    """Pure-JAX reference of the PyTorch forward (high-precision matmuls)."""
    B = x.shape[0]
    G, O = num_gaussians, out_features

    def head(p):
        h = jnp.maximum(jnp.dot(x, p["w1"], precision="highest") + p["b1"], 0.0)
        return jnp.dot(h, p["w2"], precision="highest") + p["b2"]

    pi = jax.nn.softmax(head(params["pi"]) / temperature, axis=1)
    sigma = _softplus(head(params["sigma"]), 20.0).reshape(B, G, O)
    mu = _softplus(head(params["mu"]), 0.5).reshape(B, G, O)
    return pi, sigma, mu


if __name__ == "__main__":
    # Small shapes consistent with the module's forward: minibatch is (B, in_features).
    B, IN_FEATURES, OUT_FEATURES, NUM_GAUSSIANS = 8, 32, 2, 4
    TEMPERATURE = 1.0

    key = jax.random.PRNGKey(0)
    kx, kp = jax.random.split(key)
    x = jax.random.normal(kx, (B, IN_FEATURES), jnp.float32)
    params = init_mdn_params(kp, IN_FEATURES, OUT_FEATURES, NUM_GAUSSIANS)

    pi_ref, sg_ref, mu_ref = mdn_reference(x, params, NUM_GAUSSIANS, OUT_FEATURES, TEMPERATURE)

    # --- full-f32 run: check numerics against the reference
    packed_f32 = pack_mdn_params(params, NUM_GAUSSIANS, OUT_FEATURES, TEMPERATURE, use_bf16=False)
    pi32, sg32, mu32 = mdn_forward(x, packed_f32, NUM_GAUSSIANS, OUT_FEATURES)
    jax.block_until_ready((pi32, sg32, mu32))
    assert jnp.allclose(pi32, pi_ref, atol=2e-2, rtol=2e-2)
    assert jnp.allclose(sg32, sg_ref, atol=2e-2, rtol=2e-2)
    assert jnp.allclose(mu32, mu_ref, atol=2e-2, rtol=2e-2)

    # --- default perf config: bf16 MXU operands, f32 accumulation + f32 epilogue
    packed = pack_mdn_params(params, NUM_GAUSSIANS, OUT_FEATURES, TEMPERATURE, use_bf16=True)
    pi, sigma, mu = mdn_forward(x, packed, NUM_GAUSSIANS, OUT_FEATURES)
    jax.block_until_ready((pi, sigma, mu))

    assert pi.shape == (B, NUM_GAUSSIANS)
    assert sigma.shape == (B, NUM_GAUSSIANS, OUT_FEATURES)
    assert mu.shape == (B, NUM_GAUSSIANS, OUT_FEATURES)
    # pi rows must sum to 1 (softmax over dim=1)
    assert jnp.allclose(jnp.sum(pi, axis=1), 1.0, atol=1e-5)
    # bf16 MXU inputs: loose agreement with the f32 reference
    assert jnp.allclose(pi, pi_ref, atol=5e-2, rtol=5e-2)
    assert jnp.allclose(sigma, sg_ref, atol=5e-2, rtol=5e-2)
    assert jnp.allclose(mu, mu_ref, atol=5e-2, rtol=5e-2)

    print("KERNEL_OK")
</pallas_src>

<mosaic_0001>
module attributes {stable_mosaic.version = 11 : i64} {
  func.func @_mdn_fused_kernel(%arg0: i32, %arg1: memref<8x32xf32, #tpu.memory_space<vmem>>, %arg2: memref<32x768xf32, #tpu.memory_space<vmem>>, %arg3: memref<1x768xf32, #tpu.memory_space<vmem>>, %arg4: memref<768x128xf32, #tpu.memory_space<vmem>>, %arg5: memref<1x128xf32, #tpu.memory_space<vmem>>, %arg6: memref<8x128xf32, #tpu.memory_space<vmem>>) attributes {dimension_semantics = [#tpu.dimension_semantics<parallel>], iteration_bounds = array<i64: 1>, scalar_prefetch = 0 : i64, scratch_operands = 0 : i64, tpu.core_type = #tpu.core_type<tc>, window_params = [{transform_indices = @transform_0, window_bounds = array<i64: 8, 32>}, {pipeline_mode = #tpu.pipeline_mode<synchronous>, transform_indices = @transform_1, window_bounds = array<i64: 32, 768>}, {pipeline_mode = #tpu.pipeline_mode<synchronous>, transform_indices = @transform_2, window_bounds = array<i64: 1, 768>}, {pipeline_mode = #tpu.pipeline_mode<synchronous>, transform_indices = @transform_3, window_bounds = array<i64: 768, 128>}, {pipeline_mode = #tpu.pipeline_mode<synchronous>, transform_indices = @transform_4, window_bounds = array<i64: 1, 128>}, {transform_indices = @transform_5, window_bounds = array<i64: 8, 128>}]} {
    %c0 = arith.constant 0 : index
    %c0_0 = arith.constant 0 : index
    %0 = vector.load %arg1[%c0, %c0_0] : memref<8x32xf32, #tpu.memory_space<vmem>>, vector<8x32xf32>
    %c0_1 = arith.constant 0 : index
    %c0_2 = arith.constant 0 : index
    %1 = vector.load %arg2[%c0_1, %c0_2] : memref<32x768xf32, #tpu.memory_space<vmem>>, vector<32x768xf32>
    %cst = arith.constant dense<0.000000e+00> : vector<8x768xf32>
    %2 = tpu.matmul %0, %1, %cst {dimension_numbers = #tpu.dot_dimension_numbers<[1], [0], [0], [1], [0, 0, 1, 1], [], []>} : vector<8x32xf32>, vector<32x768xf32>, vector<8x768xf32> -> vector<8x768xf32>
    %c0_3 = arith.constant 0 : index
    %c0_4 = arith.constant 0 : index
    %3 = vector.load %arg3[%c0_3, %c0_4] : memref<1x768xf32, #tpu.memory_space<vmem>>, vector<1x768xf32>
    %4 = vector.broadcast %3 : vector<1x768xf32> to vector<8x768xf32>
    %5 = arith.addf %2, %4 : vector<8x768xf32>
    %cst_5 = arith.constant 0.000000e+00 : f32
    %6 = vector.broadcast %cst_5 : f32 to vector<8x768xf32>
    %7 = arith.maximumf %5, %6 : vector<8x768xf32>
    %c0_6 = arith.constant 0 : index
    %c0_7 = arith.constant 0 : index
    %8 = vector.load %arg4[%c0_6, %c0_7] : memref<768x128xf32, #tpu.memory_space<vmem>>, vector<768x128xf32>
    %cst_8 = arith.constant dense<0.000000e+00> : vector<8x128xf32>
    %9 = tpu.matmul %7, %8, %cst_8 {dimension_numbers = #tpu.dot_dimension_numbers<[1], [0], [0], [1], [0, 0, 1, 1], [], []>} : vector<8x768xf32>, vector<768x128xf32>, vector<8x128xf32> -> vector<8x128xf32>
    %c0_9 = arith.constant 0 : index
    %c0_10 = arith.constant 0 : index
    %10 = vector.load %arg5[%c0_9, %c0_10] : memref<1x128xf32, #tpu.memory_space<vmem>>, vector<1x128xf32>
    %11 = vector.broadcast %10 : vector<1x128xf32> to vector<8x128xf32>
    %12 = arith.addf %9, %11 : vector<8x128xf32>
    %13 = tpu.iota {dimensions = array<i32: 1>} : vector<8x128xi32>
    %c4_i32 = arith.constant 4 : i32
    %14 = vector.broadcast %c4_i32 : i32 to vector<8x128xi32>
    %15 = arith.cmpi slt, %13, %14 : vector<8x128xi32>
    %cst_11 = arith.constant 0xFF800000 : f32
    %16 = vector.broadcast %cst_11 : f32 to vector<8x128xf32>
    %17 = arith.select %15, %12, %16 : vector<8x128xi1>, vector<8x128xf32>
    %cst_12 = arith.constant dense<0xFF800000> : vector<8xf32>
    %18 = vector.multi_reduction <maximumf>, %17, %cst_12 [1] : vector<8x128xf32> to vector<8xf32>
    %19 = vector.shape_cast %18 : vector<8xf32> to vector<8x1xf32>
    %20 = vector.broadcast %19 : vector<8x1xf32> to vector<8x128xf32>
    %21 = arith.subf %17, %20 : vector<8x128xf32>
    %22 = math.exp %21 : vector<8x128xf32>
    %cst_13 = arith.constant dense<0.000000e+00> : vector<8xf32>
    %23 = vector.multi_reduction <add>, %22, %cst_13 [1] : vector<8x128xf32> to vector<8xf32>
    %24 = vector.shape_cast %23 : vector<8xf32> to vector<8x1xf32>
    %25 = vector.broadcast %24 : vector<8x1xf32> to vector<8x128xf32>
    %26 = arith.divf %22, %25 : vector<8x128xf32>
    %cst_14 = arith.constant 2.000000e+01 : f32
    %27 = vector.broadcast %cst_14 : f32 to vector<8x128xf32>
    %28 = arith.minimumf %12, %27 : vector<8x128xf32>
    %cst_15 = arith.constant 2.000000e+01 : f32
    %29 = vector.broadcast %cst_15 : f32 to vector<8x128xf32>
    %30 = arith.cmpf ogt, %12, %29 : vector<8x128xf32>
    %31 = math.exp %28 : vector<8x128xf32>
    %32 = math.log1p %31 : vector<8x128xf32>
    %33 = arith.select %30, %12, %32 : vector<8x128xi1>, vector<8x128xf32>
    %cst_16 = arith.constant 5.000000e-01 : f32
    %34 = vector.broadcast %cst_16 : f32 to vector<8x128xf32>
    %35 = arith.minimumf %12, %34 : vector<8x128xf32>
    %cst_17 = arith.constant 5.000000e-01 : f32
    %36 = vector.broadcast %cst_17 : f32 to vector<8x128xf32>
    %37 = arith.cmpf ogt, %12, %36 : vector<8x128xf32>
    %38 = math.exp %35 : vector<8x128xf32>
    %39 = math.log1p %38 : vector<8x128xf32>
    %40 = arith.select %37, %12, %39 : vector<8x128xi1>, vector<8x128xf32>
    %c12_i32 = arith.constant 12 : i32
    %41 = vector.broadcast %c12_i32 : i32 to vector<8x128xi32>
    %42 = arith.cmpi slt, %13, %41 : vector<8x128xi32>
    %c20_i32 = arith.constant 20 : i32
    %43 = vector.broadcast %c20_i32 : i32 to vector<8x128xi32>
    %44 = arith.cmpi slt, %13, %43 : vector<8x128xi32>
    %cst_18 = arith.constant 0.000000e+00 : f32
    %45 = vector.broadcast %cst_18 : f32 to vector<8x128xf32>
    %46 = arith.select %44, %40, %45 : vector<8x128xi1>, vector<8x128xf32>
    %47 = arith.select %42, %33, %46 : vector<8x128xi1>, vector<8x128xf32>
    %48 = arith.select %15, %26, %47 : vector<8x128xi1>, vector<8x128xf32>
    %c0_19 = arith.constant 0 : index
    %c0_20 = arith.constant 0 : index
    %49 = vector.load %arg6[%c0_19, %c0_20] : memref<8x128xf32, #tpu.memory_space<vmem>>, vector<8x128xf32>
    tpu.vector_store %arg6[%c0_19, %c0_20], %48 {strides = array<i32>} : memref<8x128xf32, #tpu.memory_space<vmem>>, vector<8x128xf32>,
    return
  }
  func.func @transform_0(%arg0: i32) -> (i32, i32) {
    %c0_i32 = arith.constant 0 : i32
    %c0_i32_0 = arith.constant 0 : i32
    return %arg0, %c0_i32 : i32, i32
  }
  func.func @transform_1(%arg0: i32) -> (i32, i32) {
    %c0_i32 = arith.constant 0 : i32
    %c0_i32_0 = arith.constant 0 : i32
    %c0_i32_1 = arith.constant 0 : i32
    return %c0_i32, %c0_i32_0 : i32, i32
  }
  func.func @transform_2(%arg0: i32) -> (i32, i32) {
    %c0_i32 = arith.constant 0 : i32
    %c0_i32_0 = arith.constant 0 : i32
    %c0_i32_1 = arith.constant 0 : i32
    return %c0_i32, %c0_i32_0 : i32, i32
  }
  func.func @transform_3(%arg0: i32) -> (i32, i32) {
    %c0_i32 = arith.constant 0 : i32
    %c0_i32_0 = arith.constant 0 : i32
    %c0_i32_1 = arith.constant 0 : i32
    return %c0_i32, %c0_i32_0 : i32, i32
  }
  func.func @transform_4(%arg0: i32) -> (i32, i32) {
    %c0_i32 = arith.constant 0 : i32
    %c0_i32_0 = arith.constant 0 : i32
    %c0_i32_1 = arith.constant 0 : i32
    return %c0_i32, %c0_i32_0 : i32, i32
  }
  func.func @transform_5(%arg0: i32) -> (i32, i32) {
    %c0_i32 = arith.constant 0 : i32
    %c0_i32_0 = arith.constant 0 : i32
    return %arg0, %c0_i32 : i32, i32
  }
}

</mosaic_0001>

<llo_original>
// kernel: tpu_custom_call.1
$region0: #{tpu_custom_call.1}
  #allocation0 [shape = 'u32[]', space=smem, size = 0x4, offset = 0x4, fixed_abs, tag = 'smem constant byte address 0x4 - core index']
  #allocation1 [shape = 'u32[144,128]{1,0:T(1,128)}', space=vmem, size = 0x12000, scoped, tag = 'internal scratch']
  %s0 = inlined_call_operand.hbm [shape: f32[8,32], index: 0, kind: input, shape index: {}]
  %s1 = inlined_call_operand.hbm [shape: f32[32,768], index: 1, kind: input, shape index: {}]
  %s2 = inlined_call_operand.vmem [shape: f32[1,768], index: 2, kind: input, shape index: {}]
  %s3 = inlined_call_operand.hbm [shape: f32[768,128], index: 3, kind: input, shape index: {}]
  %s4 = inlined_call_operand.vmem [shape: f32[1,128], index: 4, kind: input, shape index: {}]
  %s5 = inlined_call_operand.hbm [shape: f32[8,128], index: 5, kind: output, shape index: {}]
  %s6 = sld [smem:[#allocation0]]
  $region42: #{tpu_custom_call.1} parent=0
    _
  %s8 = ssub.s32 1, %s6
  %s9 = scalar_select 0, %s8, %s6
  $region1: #{tpu_custom_call.1} parent=0
    #allocation2 [shape = 'u8[4096]{0}', space=vmem, size = 0x1000, scoped, tag = 'input window, operand 0, single buffered']
    #allocation3 [shape = 's32[1]{0}', space=sflag, size = 0x4, scoped, tag = 'scoped memory for tpu_custom_call.1']
    #allocation4 [shape = 's32[1]{0}', space=sflag, size = 0x4, scoped, tag = 'scoped memory for tpu_custom_call.1']
    #allocation5 [shape = 'u8[98304]{0}', space=vmem, size = 0x18000, scoped, tag = 'input window, operand 1, single buffered']
    #allocation6 [shape = 's32[1]{0}', space=sflag, size = 0x4, scoped, tag = 'scoped memory for tpu_custom_call.1']
    #allocation7 [shape = 'u8[393216]{0}', space=vmem, size = 0x60000, scoped, tag = 'input window, operand 3, single buffered']
    #allocation8 [shape = 'u8[4096]{0}', space=vmem, size = 0x1000, scoped, tag = 'output window, operand 0, single buffered']
    %10 = vsyncpa [#allocation3], 0
    %11 = vsyncpa [#allocation6], 0
    %12 = vsyncpa [#allocation4], 0
    // Predicated region
    $region2: #{tpu_custom_call.1} parent=1 // pred_check
      _
    $region3: #{tpu_custom_call.1} parent=1 // pred_check_branch
      %14 = sbr.rel (0) target = $region5
    $region4: #{tpu_custom_call.1} parent=1 // pred_region
      %s16 = ssub.s32 128, 128
      %17 = vsyncadd [#allocation3], %s16
      %s19 = sshll.u32 [#allocation2], 4
      %s20 = int_to_ptr.vmem [resolvable:$true] %s19
      %22 = dma.hbm_to_vmem [thread:$0]  %s0, 128, %s20, [#allocation3]
    $region5: #{tpu_custom_call.1} parent=1 // pred_fallthru
      _
    // Predicated region
    $region6: #{tpu_custom_call.1} parent=1 // pred_check
      _
    $region7: #{tpu_custom_call.1} parent=1 // pred_check_branch
      %24 = sbr.rel (0) target = $region9
    $region8: #{tpu_custom_call.1} parent=1 // pred_region
      %s26 = ssub.s32 3072, 3072
      %27 = vsyncadd [#allocation6], %s26
      %s28 = sshll.u32 [#allocation5], 4
      %s29 = int_to_ptr.vmem [resolvable:$true] %s28
      %34 = dma.hbm_to_vmem [thread:$0]  %s1, 3072, %s29, [#allocation6], 768, 768, 48
    $region9: #{tpu_custom_call.1} parent=1 // pred_fallthru
      _
    // Predicated region
    $region10: #{tpu_custom_call.1} parent=1 // pred_check
      _
    $region11: #{tpu_custom_call.1} parent=1 // pred_check_branch
      %36 = sbr.rel (0) target = $region13
    $region12: #{tpu_custom_call.1} parent=1 // pred_region
      _
    $region13: #{tpu_custom_call.1} parent=1 // pred_fallthru
      _
    // Predicated region
    $region14: #{tpu_custom_call.1} parent=1 // pred_check
      _
    $region15: #{tpu_custom_call.1} parent=1 // pred_check_branch
      %38 = sbr.rel (0) target = $region17
    $region16: #{tpu_custom_call.1} parent=1 // pred_region
      %s40 = ssub.s32 12288, 12288
      %41 = vsyncadd [#allocation6], %s40
      %s42 = sshll.u32 [#allocation7], 4
      %s43 = int_to_ptr.vmem [resolvable:$true] %s42
      %48 = dma.hbm_to_vmem [thread:$0]  %s3, 12288, %s43, [#allocation6], 128, 128, 8
    $region17: #{tpu_custom_call.1} parent=1 // pred_fallthru
      _
    // Predicated region
    $region18: #{tpu_custom_call.1} parent=1 // pred_check
      _
    $region19: #{tpu_custom_call.1} parent=1 // pred_check_branch
      %50 = sbr.rel (0) target = $region21
    $region20: #{tpu_custom_call.1} parent=1 // pred_region
      _
    $region21: #{tpu_custom_call.1} parent=1 // pred_fallthru
      _
    // Predicated region
    $region22: #{tpu_custom_call.1} parent=1 // pred_check
      _
    $region23: #{tpu_custom_call.1} parent=1 // pred_check_branch
      %52 = sbr.rel (0) target = $region25
    $region24: #{tpu_custom_call.1} parent=1 // pred_region
      %53 = dma.done [#allocation3], 128
    $region25: #{tpu_custom_call.1} parent=1 // pred_fallthru
      _
    // Predicated region
    $region26: #{tpu_custom_call.1} parent=1 // pred_check
      _
    $region27: #{tpu_custom_call.1} parent=1 // pred_check_branch
      %55 = sbr.rel (0) target = $region29
    $region28: #{tpu_custom_call.1} parent=1 // pred_region
      %56 = dma.done [#allocation6], 3072
    $region29: #{tpu_custom_call.1} parent=1 // pred_fallthru
      _
    // Predicated region
    $region30: #{tpu_custom_call.1} parent=1 // pred_check
      _
    $region31: #{tpu_custom_call.1} parent=1 // pred_check_branch
      %58 = sbr.rel (0) target = $region33
    $region32: #{tpu_custom_call.1} parent=1 // pred_region
      %59 = dma.done [#allocation6], 12288
    $region33: #{tpu_custom_call.1} parent=1 // pred_fallthru
      _
    %v60 = vld [vmem:[#allocation2] sm:$0xff]
    %v61 = vld [vmem:[#allocation5] sm:$0xff]
    %v62 = vld [vmem:[#allocation5 + $0x8] sm:$0xff]
    %v63 = vld [vmem:[#allocation5 + $0x10] sm:$0xff]
    %v64 = vld [vmem:[#allocation5 + $0x18] sm:$0xff]
    %v65 = vld [vmem:[#allocation5 + $0x20] sm:$0xff]
    %v66 = vld [vmem:[#allocation5 + $0x28] sm:$0xff]
    %v67 = vld [vmem:[#allocation5 + $0x30] sm:$0xff]
    %v68 = vld [vmem:[#allocation5 + $0x38] sm:$0xff]
    %v69 = vld [vmem:[#allocation5 + $0x40] sm:$0xff]
    %v70 = vld [vmem:[#allocation5 + $0x48] sm:$0xff]
    %v71 = vld [vmem:[#allocation5 + $0x50] sm:$0xff]
    %v72 = vld [vmem:[#allocation5 + $0x58] sm:$0xff]
    %v73 = vld [vmem:[#allocation5 + $0x60] sm:$0xff]
    %v74 = vld [vmem:[#allocation5 + $0x68] sm:$0xff]
    %v75 = vld [vmem:[#allocation5 + $0x70] sm:$0xff]
    %v76 = vld [vmem:[#allocation5 + $0x78] sm:$0xff]
    %v77 = vld [vmem:[#allocation5 + $0x80] sm:$0xff]
    %v78 = vld [vmem:[#allocation5 + $0x88] sm:$0xff]
    %v79 = vld [vmem:[#allocation5 + $0x90] sm:$0xff]
    %v80 = vld [vmem:[#allocation5 + $0x98] sm:$0xff]
    %v81 = vld [vmem:[#allocation5 + $0xa0] sm:$0xff]
    %v82 = vld [vmem:[#allocation5 + $0xa8] sm:$0xff]
    %v83 = vld [vmem:[#allocation5 + $0xb0] sm:$0xff]
    %v84 = vld [vmem:[#allocation5 + $0xb8] sm:$0xff]
    %v85 = vld [vmem:[%s2] sm:$0x3f]
    %v87 = vlaneseq
    %v88 = vshrl.u32 %v87, 7
    %v89 = vsub.s32 0, %v88
    %v90 = vrot.slane %v85, %v89
    %v91 = vlaneseq
    %v92 = vshrl.u32 %v91, 7
    %v93 = vsub.s32 1, %v92
    %v94 = vrot.slane %v85, %v93
    %v95 = vlaneseq
    %v96 = vshrl.u32 %v95, 7
    %v97 = vsub.s32 2, %v96
    %v98 = vrot.slane %v85, %v97
    %v99 = vlaneseq
    %v100 = vshrl.u32 %v99, 7
    %v101 = vsub.s32 3, %v100
    %v102 = vrot.slane %v85, %v101
    %v103 = vlaneseq
    %v104 = vshrl.u32 %v103, 7
    %v105 = vsub.s32 4, %v104
    %v106 = vrot.slane %v85, %v105
    %v107 = vlaneseq
    %v108 = vshrl.u32 %v107, 7
    %v109 = vsub.s32 5, %v108
    %v110 = vrot.slane %v85, %v109
    %vm117 = vcmask 261120
    %v119 = vsel %vm117, %v60, 0
    %121 = vmatprep.subr.mxu0 %v62
    %122 = vmatpush1.msra.mxu0 %v61
    %123 = vmatprep.subr.mxu0 %v68
    %124 = vmatpush1.msra.mxu0 %v67
    %125 = vmatprep.subr.mxu0 %v74
    %126 = vmatpush1.msra.mxu0 %v73
    %127 = vmatprep.subr.mxu0 %v80
    %128 = vmatpush1.msra.mxu0 %v79
    %129 = vmatprep.subr.mxu0 0.0
    %130 = vmatpush1.msra.mxu0 0.0
    %131 = vmatprep.subr.mxu0 0.0
    %132 = vmatpush1.msra.mxu0 0.0
    %133 = vmatprep.subr.mxu0 0.0
    %134 = vmatpush1.msra.mxu0 0.0
    %135 = vmatprep.subr.mxu0 0.0
    %136 = vmatpush1.msra.mxu0 0.0
    %137 = vmatprep.subr.mxu0 0.0
    %138 = vmatpush1.msra.mxu0 0.0
    %139 = vmatprep.subr.mxu0 0.0
    %140 = vmatpush1.msra.mxu0 0.0
    %141 = vmatprep.subr.mxu0 0.0
    %142 = vmatpush1.msra.mxu0 0.0
    %143 = vmatprep.subr.mxu0 0.0
    %144 = vmatpush1.msra.mxu0 0.0
    %145 = vmatprep.subr.mxu0 0.0
    %146 = vmatpush1.msra.mxu0 0.0
    %147 = vmatprep.subr.mxu0 0.0
    %148 = vmatpush1.msra.mxu0 0.0
    %149 = vmatprep.subr.mxu0 0.0
    %150 = vmatpush1.msra.mxu0 0.0
    %151 = vmatprep.subr.mxu0 0.0
    %152 = vmatpush1.msra.mxu0 0.0
    %153 = vmatprep.subr.mxu0 0.0
    %154 = vmatpush1.msra.mxu0 0.0
    %155 = vmatprep.subr.mxu0 0.0
    %156 = vmatpush1.msra.mxu0 0.0
    %157 = vmatprep.subr.mxu0 0.0
    %158 = vmatpush1.msra.mxu0 0.0
    %159 = vmatprep.subr.mxu0 0.0
    %160 = vmatpush1.msra.mxu0 0.0
    %161 = vmatprep.subr.mxu0 0.0
    %162 = vmatpush1.msra.mxu0 0.0
    %163 = vmatprep.subr.mxu0 0.0
    %164 = vmatpush1.msra.mxu0 0.0
    %165 = vmatprep.subr.mxu0 0.0
    %166 = vmatpush1.msra.mxu0 0.0
    %167 = vmatprep.subr.mxu0 0.0
    %168 = vmatpush1.msra.mxu0 0.0
    %169 = vmatprep.subr.mxu0 0.0
    %170 = vmatpush1.msra.mxu0 0.0
    %171 = vmatprep.subr.mxu0 0.0
    %172 = vmatpush1.msra.mxu0 0.0
    %173 = vmatprep.subr.mxu0 0.0
    %174 = vmatpush1.msra.mxu0 0.0
    %175 = vmatprep.subr.mxu0 0.0
    %176 = vmatpush1.msra.mxu0 0.0
    %177 = vmatprep.subr.mxu0 0.0
    %178 = vmatpush1.msra.mxu0 0.0
    %179 = vmatprep.subr.mxu0 0.0
    %180 = vmatpush1.msra.mxu0 0.0
    %181 = vmatprep.subr.mxu0 0.0
    %182 = vmatpush1.msra.mxu0 0.0
    %183 = vmatprep.subr.mxu0 0.0
    %184 = vmatpush1.msra.mxu0 0.0
    %185 = vmatprep.mubr.f32.mxu0 0.0
    %186 = vmatmul.mubr.f32.gmra.mrb[0].mxu0 %v119
    %v187 = vpop.f32.mrb[0].mxu0
    %v188 = vadd.f32 %v90, %v187
    %v189 = vpop.f32.mrb[0].mxu0
    %v190 = vadd.f32 %v94, %v189
    %191 = vdwg.mxu0
    %192 = vmatprep.subr.mxu0 %v64
    %193 = vmatpush1.msra.mxu0 %v63
    %194 = vmatprep.subr.mxu0 %v70
    %195 = vmatpush1.msra.mxu0 %v69
    %196 = vmatprep.subr.mxu0 %v76
    %197 = vmatpush1.msra.mxu0 %v75
    %198 = vmatprep.subr.mxu0 %v82
    %199 = vmatpush1.msra.mxu0 %v81
    %200 = vmatprep.subr.mxu0 0.0
    %201 = vmatpush1.msra.mxu0 0.0
    %202 = vmatprep.subr.mxu0 0.0
    %203 = vmatpush1.msra.mxu0 0.0
    %204 = vmatprep.subr.mxu0 0.0
    %205 = vmatpush1.msra.mxu0 0.0
    %206 = vmatprep.subr.mxu0 0.0
    %207 = vmatpush1.msra.mxu0 0.0
    %208 = vmatprep.subr.mxu0 0.0
    %209 = vmatpush1.msra.mxu0 0.0
    %210 = vmatprep.subr.mxu0 0.0
    %211 = vmatpush1.msra.mxu0 0.0
    %212 = vmatprep.subr.mxu0 0.0
    %213 = vmatpush1.msra.mxu0 0.0
    %214 = vmatprep.subr.mxu0 0.0
    %215 = vmatpush1.msra.mxu0 0.0
    %216 = vmatprep.subr.mxu0 0.0
    %217 = vmatpush1.msra.mxu0 0.0
    %218 = vmatprep.subr.mxu0 0.0
    %219 = vmatpush1.msra.mxu0 0.0
    %220 = vmatprep.subr.mxu0 0.0
    %221 = vmatpush1.msra.mxu0 0.0
    %222 = vmatprep.subr.mxu0 0.0
    %223 = vmatpush1.msra.mxu0 0.0
    %224 = vmatprep.subr.mxu0 0.0
    %225 = vmatpush1.msra.mxu0 0.0
    %226 = vmatprep.subr.mxu0 0.0
    %227 = vmatpush1.msra.mxu0 0.0
    %228 = vmatprep.subr.mxu0 0.0
    %229 = vmatpush1.msra.mxu0 0.0
    %230 = vmatprep.subr.mxu0 0.0
    %231 = vmatpush1.msra.mxu0 0.0
    %232 = vmatprep.subr.mxu0 0.0
    %233 = vmatpush1.msra.mxu0 0.0
    %234 = vmatprep.subr.mxu0 0.0
    %235 = vmatpush1.msra.mxu0 0.0
    %236 = vmatprep.subr.mxu0 0.0
    %237 = vmatpush1.msra.mxu0 0.0
    %238 = vmatprep.subr.mxu0 0.0
    %239 = vmatpush1.msra.mxu0 0.0
    %240 = vmatprep.subr.mxu0 0.0
    %241 = vmatpush1.msra.mxu0 0.0
    %242 = vmatprep.subr.mxu0 0.0
    %243 = vmatpush1.msra.mxu0 0.0
    %244 = vmatprep.subr.mxu0 0.0
    %245 = vmatpush1.msra.mxu0 0.0
    %246 = vmatprep.subr.mxu0 0.0
    %247 = vmatpush1.msra.mxu0 0.0
    %248 = vmatprep.subr.mxu0 0.0
    %249 = vmatpush1.msra.mxu0 0.0
    %250 = vmatprep.subr.mxu0 0.0
    %251 = vmatpush1.msra.mxu0 0.0
    %252 = vmatprep.subr.mxu0 0.0
    %253 = vmatpush1.msra.mxu0 0.0
    %254 = vmatprep.subr.mxu0 0.0
    %255 = vmatpush1.msra.mxu0 0.0
    %256 = vmatprep.mubr.f32.mxu0 0.0
    %257 = vmatmul.mubr.f32.gmra.mrb[0].mxu0 %v119
    %v258 = vpop.f32.mrb[0].mxu0
    %v259 = vadd.f32 %v98, %v258
    %v260 = vpop.f32.mrb[0].mxu0
    %v261 = vadd.f32 %v102, %v260
    %262 = vdwg.mxu0
    %263 = vmatprep.subr.mxu0 %v66
    %264 = vmatpush1.msra.mxu0 %v65
    %265 = vmatprep.subr.mxu0 %v72
    %266 = vmatpush1.msra.mxu0 %v71
    %267 = vmatprep.subr.mxu0 %v78
    %268 = vmatpush1.msra.mxu0 %v77
    %269 = vmatprep.subr.mxu0 %v84
    %270 = vmatpush1.msra.mxu0 %v83
    %271 = vmatprep.subr.mxu0 0.0
    %272 = vmatpush1.msra.mxu0 0.0
    %273 = vmatprep.subr.mxu0 0.0
    %274 = vmatpush1.msra.mxu0 0.0
    %275 = vmatprep.subr.mxu0 0.0
    %276 = vmatpush1.msra.mxu0 0.0
    %277 = vmatprep.subr.mxu0 0.0
    %278 = vmatpush1.msra.mxu0 0.0
    %279 = vmatprep.subr.mxu0 0.0
    %280 = vmatpush1.msra.mxu0 0.0
    %281 = vmatprep.subr.mxu0 0.0
    %282 = vmatpush1.msra.mxu0 0.0
    %283 = vmatprep.subr.mxu0 0.0
    %284 = vmatpush1.msra.mxu0 0.0
    %285 = vmatprep.subr.mxu0 0.0
    %286 = vmatpush1.msra.mxu0 0.0
    %287 = vmatprep.subr.mxu0 0.0
    %288 = vmatpush1.msra.mxu0 0.0
    %289 = vmatprep.subr.mxu0 0.0
    %290 = vmatpush1.msra.mxu0 0.0
    %291 = vmatprep.subr.mxu0 0.0
    %292 = vmatpush1.msra.mxu0 0.0
    %293 = vmatprep.subr.mxu0 0.0
    %294 = vmatpush1.msra.mxu0 0.0
    %295 = vmatprep.subr.mxu0 0.0
    %296 = vmatpush1.msra.mxu0 0.0
    %297 = vmatprep.subr.mxu0 0.0
    %298 = vmatpush1.msra.mxu0 0.0
    %299 = vmatprep.subr.mxu0 0.0
    %300 = vmatpush1.msra.mxu0 0.0
    %301 = vmatprep.subr.mxu0 0.0
    %302 = vmatpush1.msra.mxu0 0.0
    %303 = vmatprep.subr.mxu0 0.0
    %304 = vmatpush1.msra.mxu0 0.0
    %305 = vmatprep.subr.mxu0 0.0
    %306 = vmatpush1.msra.mxu0 0.0
    %307 = vmatprep.subr.mxu0 0.0
    %308 = vmatpush1.msra.mxu0 0.0
    %309 = vmatprep.subr.mxu0 0.0
    %310 = vmatpush1.msra.mxu0 0.0
    %311 = vmatprep.subr.mxu0 0.0
    %312 = vmatpush1.msra.mxu0 0.0
    %313 = vmatprep.subr.mxu0 0.0
    %314 = vmatpush1.msra.mxu0 0.0
    %315 = vmatprep.subr.mxu0 0.0
    %316 = vmatpush1.msra.mxu0 0.0
    %317 = vmatprep.subr.mxu0 0.0
    %318 = vmatpush1.msra.mxu0 0.0
    %319 = vmatprep.subr.mxu0 0.0
    %320 = vmatpush1.msra.mxu0 0.0
    %321 = vmatprep.subr.mxu0 0.0
    %322 = vmatpush1.msra.mxu0 0.0
    %323 = vmatprep.subr.mxu0 0.0
    %324 = vmatpush1.msra.mxu0 0.0
    %325 = vmatprep.subr.mxu0 0.0
    %326 = vmatpush1.msra.mxu0 0.0
    %327 = vmatprep.mubr.f32.mxu0 0.0
    %328 = vmatmul.mubr.f32.gmra.mrb[0].mxu0 %v119
    %v329 = vpop.f32.mrb[0].mxu0
    %v330 = vadd.f32 %v106, %v329
    %v331 = vpop.f32.mrb[0].mxu0
    %v332 = vadd.f32 %v110, %v331
    %333 = vdwg.mxu0
    %v334 = vmax.f32 %v188, 0.0
    %v335 = vmax.f32 %v190, 0.0
    %v336 = vmax.f32 %v259, 0.0
    %v337 = vmax.f32 %v261, 0.0
    %v338 = vmax.f32 %v330, 0.0
    %v339 = vmax.f32 %v332, 0.0
    %v340 = vld [vmem:[#allocation7] sm:$0xff]
    %v341 = vld [vmem:[#allocation7 + $0x8] sm:$0xff]
    %v342 = vld [vmem:[#allocation7 + $0x10] sm:$0xff]
    %v343 = vld [vmem:[#allocation7 + $0x18] sm:$0xff]
    %v344 = vld [vmem:[#allocation7 + $0x20] sm:$0xff]
    %v345 = vld [vmem:[#allocation7 + $0x28] sm:$0xff]
    %v346 = vld [vmem:[#allocation7 + $0x30] sm:$0xff]
    %v347 = vld [vmem:[#allocation7 + $0x38] sm:$0xff]
    %v348 = vld [vmem:[#allocation7 + $0x40] sm:$0xff]
    %v349 = vld [vmem:[#allocation7 + $0x48] sm:$0xff]
    %v350 = vld [vmem:[#allocation7 + $0x50] sm:$0xff]
    %v351 = vld [vmem:[#allocation7 + $0x58] sm:$0xff]
    %v352 = vld [vmem:[#allocation7 + $0x60] sm:$0xff]
    %v353 = vld [vmem:[#allocation7 + $0x68] sm:$0xff]
    %v354 = vld [vmem:[#allocation7 + $0x70] sm:$0xff]
    %v355 = vld [vmem:[#allocation7 + $0x78] sm:$0xff]
    %v356 = vld [vmem:[#allocation7 + $0x80] sm:$0xff]
    %v357 = vld [vmem:[#allocation7 + $0x88] sm:$0xff]
    %v358 = vld [vmem:[#allocation7 + $0x90] sm:$0xff]
    %v359 = vld [vmem:[#allocation7 + $0x98] sm:$0xff]
    %v360 = vld [vmem:[#allocation7 + $0xa0] sm:$0xff]
    %v361 = vld [vmem:[#allocation7 + $0xa8] sm:$0xff]
    %v362 = vld [vmem:[#allocation7 + $0xb0] sm:$0xff]
    %v363 = vld [vmem:[#allocation7 + $0xb8] sm:$0xff]
    %v364 = vld [vmem:[#allocation7 + $0xc0] sm:$0xff]
    %v365 = vld [vmem:[#allocation7 + $0xc8] sm:$0xff]
    %v366 = vld [vmem:[#allocation7 + $0xd0] sm:$0xff]
    %v367 = vld [vmem:[#allocation7 + $0xd8] sm:$0xff]
    %v368 = vld [vmem:[#allocation7 + $0xe0] sm:$0xff]
    %v369 = vld [vmem:[#allocation7 + $0xe8] sm:$0xff]
    %v370 = vld [vmem:[#allocation7 + $0xf0] sm:$0xff]
    %v371 = vld [vmem:[#allocation7 + $0xf8] sm:$0xff]
    %v372 = vld [vmem:[#allocation7 + $0x100] sm:$0xff]
    %v373 = vld [vmem:[#allocation7 + $0x108] sm:$0xff]
    %v374 = vld [vmem:[#allocation7 + $0x110] sm:$0xff]
    %v375 = vld [vmem:[#allocation7 + $0x118] sm:$0xff]
    %v376 = vld [vmem:[#allocation7 + $0x120] sm:$0xff]
    %v377 = vld [vmem:[#allocation7 + $0x128] sm:$0xff]
    %v378 = vld [vmem:[#allocation7 + $0x130] sm:$0xff]
    %v379 = vld [vmem:[#allocation7 + $0x138] sm:$0xff]
    %v380 = vld [vmem:[#allocation7 + $0x140] sm:$0xff]
    %v381 = vld [vmem:[#allocation7 + $0x148] sm:$0xff]
    %v382 = vld [vmem:[#allocation7 + $0x150] sm:$0xff]
    %v383 = vld [vmem:[#allocation7 + $0x158] sm:$0xff]
    %v384 = vld [vmem:[#allocation7 + $0x160] sm:$0xff]
    %v385 = vld [vmem:[#allocation7 + $0x168] sm:$0xff]
    %v386 = vld [vmem:[#allocation7 + $0x170] sm:$0xff]
    %v387 = vld [vmem:[#allocation7 + $0x178] sm:$0xff]
    %v388 = vld [vmem:[#allocation7 + $0x180] sm:$0xff]
    %v389 = vld [vmem:[#allocation7 + $0x188] sm:$0xff]
    %v390 = vld [vmem:[#allocation7 + $0x190] sm:$0xff]
    %v391 = vld [vmem:[#allocation7 + $0x198] sm:$0xff]
    %v392 = vld [vmem:[#allocation7 + $0x1a0] sm:$0xff]
    %v393 = vld [vmem:[#allocation7 + $0x1a8] sm:$0xff]
    %v394 = vld [vmem:[#allocation7 + $0x1b0] sm:$0xff]
    %v395 = vld [vmem:[#allocation7 + $0x1b8] sm:$0xff]
    %v396 = vld [vmem:[#allocation7 + $0x1c0] sm:$0xff]
    %v397 = vld [vmem:[#allocation7 + $0x1c8] sm:$0xff]
    %v398 = vld [vmem:[#allocation7 + $0x1d0] sm:$0xff]
    %v399 = vld [vmem:[#allocation7 + $0x1d8] sm:$0xff]
    %v400 = vld [vmem:[#allocation7 + $0x1e0] sm:$0xff]
    %v401 = vld [vmem:[#allocation7 + $0x1e8] sm:$0xff]
    %v402 = vld [vmem:[#allocation7 + $0x1f0] sm:$0xff]
    %v403 = vld [vmem:[#allocation7 + $0x1f8] sm:$0xff]
    %v404 = vld [vmem:[#allocation7 + $0x200] sm:$0xff]
    %v405 = vld [vmem:[#allocation7 + $0x208] sm:$0xff]
    %v406 = vld [vmem:[#allocation7 + $0x210] sm:$0xff]
    %v407 = vld [vmem:[#allocation7 + $0x218] sm:$0xff]
    %v408 = vld [vmem:[#allocation7 + $0x220] sm:$0xff]
    %v409 = vld [vmem:[#allocation7 + $0x228] sm:$0xff]
    %v410 = vld [vmem:[#allocation7 + $0x230] sm:$0xff]
    %v411 = vld [vmem:[#allocation7 + $0x238] sm:$0xff]
    %v412 = vld [vmem:[#allocation7 + $0x240] sm:$0xff]
    %v413 = vld [vmem:[#allocation7 + $0x248] sm:$0xff]
    %v414 = vld [vmem:[#allocation7 + $0x250] sm:$0xff]
    %v415 = vld [vmem:[#allocation7 + $0x258] sm:$0xff]
    %v416 = vld [vmem:[#allocation7 + $0x260] sm:$0xff]
    %v417 = vld [vmem:[#allocation7 + $0x268] sm:$0xff]
    %v418 = vld [vmem:[#allocation7 + $0x270] sm:$0xff]
    %v419 = vld [vmem:[#allocation7 + $0x278] sm:$0xff]
    %v420 = vld [vmem:[#allocation7 + $0x280] sm:$0xff]
    %v421 = vld [vmem:[#allocation7 + $0x288] sm:$0xff]
    %v422 = vld [vmem:[#allocation7 + $0x290] sm:$0xff]
    %v423 = vld [vmem:[#allocation7 + $0x298] sm:$0xff]
    %v424 = vld [vmem:[#allocation7 + $0x2a0] sm:$0xff]
    %v425 = vld [vmem:[#allocation7 + $0x2a8] sm:$0xff]
    %v426 = vld [vmem:[#allocation7 + $0x2b0] sm:$0xff]
    %v427 = vld [vmem:[#allocation7 + $0x2b8] sm:$0xff]
    %v428 = vld [vmem:[#allocation7 + $0x2c0] sm:$0xff]
    %v429 = vld [vmem:[#allocation7 + $0x2c8] sm:$0xff]
    %v430 = vld [vmem:[#allocation7 + $0x2d0] sm:$0xff]
    %v431 = vld [vmem:[#allocation7 + $0x2d8] sm:$0xff]
    %v432 = vld [vmem:[#allocation7 + $0x2e0] sm:$0xff]
    %v433 = vld [vmem:[#allocation7 + $0x2e8] sm:$0xff]
    %v434 = vld [vmem:[#allocation7 + $0x2f0] sm:$0xff]
    %v435 = vld [vmem:[#allocation7 + $0x2f8] sm:$0xff]
    %v436 = vld [vmem:[%s4] sm:$0x1]
    %v438 = vlaneseq
    %v439 = vshrl.u32 %v438, 7
    %v440 = vsub.s32 0, %v439
    %v441 = vrot.slane %v436, %v440
    %443 = vmatprep.subr.mxu0 0.0
    %444 = vmatpush1.msra.mxu0 %v340
    %445 = vmatprep.subr.mxu0 0.0
    %446 = vmatpush1.msra.mxu0 %v341
    %447 = vmatprep.subr.mxu0 0.0
    %448 = vmatpush1.msra.mxu0 %v342
    %449 = vmatprep.subr.mxu0 0.0
    %450 = vmatpush1.msra.mxu0 %v343
    %451 = vmatprep.subr.mxu0 0.0
    %452 = vmatpush1.msra.mxu0 %v344
    %453 = vmatprep.subr.mxu0 0.0
    %454 = vmatpush1.msra.mxu0 %v345
    %455 = vmatprep.subr.mxu0 0.0
    %456 = vmatpush1.msra.mxu0 %v346
    %457 = vmatprep.subr.mxu0 0.0
    %458 = vmatpush1.msra.mxu0 %v347
    %459 = vmatprep.subr.mxu0 0.0
    %460 = vmatpush1.msra.mxu0 %v348
    %461 = vmatprep.subr.mxu0 0.0
    %462 = vmatpush1.msra.mxu0 %v349
    %463 = vmatprep.subr.mxu0 0.0
    %464 = vmatpush1.msra.mxu0 %v350
    %465 = vmatprep.subr.mxu0 0.0
    %466 = vmatpush1.msra.mxu0 %v351
    %467 = vmatprep.subr.mxu0 0.0
    %468 = vmatpush1.msra.mxu0 %v352
    %469 = vmatprep.subr.mxu0 0.0
    %470 = vmatpush1.msra.mxu0 %v353
    %471 = vmatprep.subr.mxu0 0.0
    %472 = vmatpush1.msra.mxu0 %v354
    %473 = vmatprep.subr.mxu0 0.0
    %474 = vmatpush1.msra.mxu0 %v355
    %475 = vmatprep.subr.mxu0 0.0
    %476 = vmatpush1.msra.mxu0 %v356
    %477 = vmatprep.subr.mxu0 0.0
    %478 = vmatpush1.msra.mxu0 %v357
    %479 = vmatprep.subr.mxu0 0.0
    %480 = vmatpush1.msra.mxu0 %v358
    %481 = vmatprep.subr.mxu0 0.0
    %482 = vmatpush1.msra.mxu0 %v359
    %483 = vmatprep.subr.mxu0 0.0
    %484 = vmatpush1.msra.mxu0 %v360
    %485 = vmatprep.subr.mxu0 0.0
    %486 = vmatpush1.msra.mxu0 %v361
    %487 = vmatprep.subr.mxu0 0.0
    %488 = vmatpush1.msra.mxu0 %v362
    %489 = vmatprep.subr.mxu0 0.0
    %490 = vmatpush1.msra.mxu0 %v363
    %491 = vmatprep.subr.mxu0 0.0
    %492 = vmatpush1.msra.mxu0 %v364
    %493 = vmatprep.subr.mxu0 0.0
    %494 = vmatpush1.msra.mxu0 %v365
    %495 = vmatprep.subr.mxu0 0.0
    %496 = vmatpush1.msra.mxu0 %v366
    %497 = vmatprep.subr.mxu0 0.0
    %498 = vmatpush1.msra.mxu0 %v367
    %499 = vmatprep.subr.mxu0 0.0
    %500 = vmatpush1.msra.mxu0 %v368
    %501 = vmatprep.subr.mxu0 0.0
    %502 = vmatpush1.msra.mxu0 %v369
    %503 = vmatprep.subr.mxu0 0.0
    %504 = vmatpush1.msra.mxu0 %v370
    %505 = vmatprep.subr.mxu0 0.0
    %506 = vmatpush1.msra.mxu0 %v371
    %507 = vmatprep.mubr.f32.mxu0 %v335
    %508 = vmatmul.mubr.f32.gmra.mrb[0].mxu0 %v334
    %v509 = vpop.f32.mrb[0].mxu0
    %v510 = vadd.f32 %v441, %v509
    %v511 = vpop.f32.mrb[0].mxu0
    %512 = vdwg.mxu0
    %513 = vmatprep.subr.mxu0 0.0
    %514 = vmatpush1.msra.mxu0 %v372
    %515 = vmatprep.subr.mxu0 0.0
    %516 = vmatpush1.msra.mxu0 %v373
    %517 = vmatprep.subr.mxu0 0.0
    %518 = vmatpush1.msra.mxu0 %v374
    %519 = vmatprep.subr.mxu0 0.0
    %520 = vmatpush1.msra.mxu0 %v375
    %521 = vmatprep.subr.mxu0 0.0
    %522 = vmatpush1.msra.mxu0 %v376
    %523 = vmatprep.subr.mxu0 0.0
    %524 = vmatpush1.msra.mxu0 %v377
    %525 = vmatprep.subr.mxu0 0.0
    %526 = vmatpush1.msra.mxu0 %v378
    %527 = vmatprep.subr.mxu0 0.0
    %528 = vmatpush1.msra.mxu0 %v379
    %529 = vmatprep.subr.mxu0 0.0
    %530 = vmatpush1.msra.mxu0 %v380
    %531 = vmatprep.subr.mxu0 0.0
    %532 = vmatpush1.msra.mxu0 %v381
    %533 = vmatprep.subr.mxu0 0.0
    %534 = vmatpush1.msra.mxu0 %v382
    %535 = vmatprep.subr.mxu0 0.0
    %536 = vmatpush1.msra.mxu0 %v383
    %537 = vmatprep.subr.mxu0 0.0
    %538 = vmatpush1.msra.mxu0 %v384
    %539 = vmatprep.subr.mxu0 0.0
    %540 = vmatpush1.msra.mxu0 %v385
    %541 = vmatprep.subr.mxu0 0.0
    %542 = vmatpush1.msra.mxu0 %v386
    %543 = vmatprep.subr.mxu0 0.0
    %544 = vmatpush1.msra.mxu0 %v387
    %545 = vmatprep.subr.mxu0 0.0
    %546 = vmatpush1.msra.mxu0 %v388
    %547 = vmatprep.subr.mxu0 0.0
    %548 = vmatpush1.msra.mxu0 %v389
    %549 = vmatprep.subr.mxu0 0.0
    %550 = vmatpush1.msra.mxu0 %v390
    %551 = vmatprep.subr.mxu0 0.0
    %552 = vmatpush1.msra.mxu0 %v391
    %553 = vmatprep.subr.mxu0 0.0
    %554 = vmatpush1.msra.mxu0 %v392
    %555 = vmatprep.subr.mxu0 0.0
    %556 = vmatpush1.msra.mxu0 %v393
    %557 = vmatprep.subr.mxu0 0.0
    %558 = vmatpush1.msra.mxu0 %v394
    %559 = vmatprep.subr.mxu0 0.0
    %560 = vmatpush1.msra.mxu0 %v395
    %561 = vmatprep.subr.mxu0 0.0
    %562 = vmatpush1.msra.mxu0 %v396
    %563 = vmatprep.subr.mxu0 0.0
    %564 = vmatpush1.msra.mxu0 %v397
    %565 = vmatprep.subr.mxu0 0.0
    %566 = vmatpush1.msra.mxu0 %v398
    %567 = vmatprep.subr.mxu0 0.0
    %568 = vmatpush1.msra.mxu0 %v399
    %569 = vmatprep.subr.mxu0 0.0
    %570 = vmatpush1.msra.mxu0 %v400
    %571 = vmatprep.subr.mxu0 0.0
    %572 = vmatpush1.msra.mxu0 %v401
    %573 = vmatprep.subr.mxu0 0.0
    %574 = vmatpush1.msra.mxu0 %v402
    %575 = vmatprep.subr.mxu0 0.0
    %576 = vmatpush1.msra.mxu0 %v403
    %577 = vmatprep.mubr.f32.mxu0 %v337
    %578 = vmatmul.mubr.f32.gmra.mrb[0].mxu0 %v336
    %v579 = vpop.f32.mrb[0].mxu0
    %v580 = vadd.f32 %v510, %v579
    %v581 = vpop.f32.mrb[0].mxu0
    %582 = vdwg.mxu0
    %583 = vmatprep.subr.mxu0 0.0
    %584 = vmatpush1.msra.mxu0 %v404
    %585 = vmatprep.subr.mxu0 0.0
    %586 = vmatpush1.msra.mxu0 %v405
    %587 = vmatprep.subr.mxu0 0.0
    %588 = vmatpush1.msra.mxu0 %v406
    %589 = vmatprep.subr.mxu0 0.0
    %590 = vmatpush1.msra.mxu0 %v407
    %591 = vmatprep.subr.mxu0 0.0
    %592 = vmatpush1.msra.mxu0 %v408
    %593 = vmatprep.subr.mxu0 0.0
    %594 = vmatpush1.msra.mxu0 %v409
    %595 = vmatprep.subr.mxu0 0.0
    %596 = vmatpush1.msra.mxu0 %v410
    %597 = vmatprep.subr.mxu0 0.0
    %598 = vmatpush1.msra.mxu0 %v411
    %599 = vmatprep.subr.mxu0 0.0
    %600 = vmatpush1.msra.mxu0 %v412
    %601 = vmatprep.subr.mxu0 0.0
    %602 = vmatpush1.msra.mxu0 %v413
    %603 = vmatprep.subr.mxu0 0.0
    %604 = vmatpush1.msra.mxu0 %v414
    %605 = vmatprep.subr.mxu0 0.0
    %606 = vmatpush1.msra.mxu0 %v415
    %607 = vmatprep.subr.mxu0 0.0
    %608 = vmatpush1.msra.mxu0 %v416
    %609 = vmatprep.subr.mxu0 0.0
    %610 = vmatpush1.msra.mxu0 %v417
    %611 = vmatprep.subr.mxu0 0.0
    %612 = vmatpush1.msra.mxu0 %v418
    %613 = vmatprep.subr.mxu0 0.0
    %614 = vmatpush1.msra.mxu0 %v419
    %615 = vmatprep.subr.mxu0 0.0
    %616 = vmatpush1.msra.mxu0 %v420
    %617 = vmatprep.subr.mxu0 0.0
    %618 = vmatpush1.msra.mxu0 %v421
    %619 = vmatprep.subr.mxu0 0.0
    %620 = vmatpush1.msra.mxu0 %v422
    %621 = vmatprep.subr.mxu0 0.0
    %622 = vmatpush1.msra.mxu0 %v423
    %623 = vmatprep.subr.mxu0 0.0
    %624 = vmatpush1.msra.mxu0 %v424
    %625 = vmatprep.subr.mxu0 0.0
    %626 = vmatpush1.msra.mxu0 %v425
    %627 = vmatprep.subr.mxu0 0.0
    %628 = vmatpush1.msra.mxu0 %v426
    %629 = vmatprep.subr.mxu0 0.0
    %630 = vmatpush1.msra.mxu0 %v427
    %631 = vmatprep.subr.mxu0 0.0
    %632 = vmatpush1.msra.mxu0 %v428
    %633 = vmatprep.subr.mxu0 0.0
    %634 = vmatpush1.msra.mxu0 %v429
    %635 = vmatprep.subr.mxu0 0.0
    %636 = vmatpush1.msra.mxu0 %v430
    %637 = vmatprep.subr.mxu0 0.0
    %638 = vmatpush1.msra.mxu0 %v431
    %639 = vmatprep.subr.mxu0 0.0
    %640 = vmatpush1.msra.mxu0 %v432
    %641 = vmatprep.subr.mxu0 0.0
    %642 = vmatpush1.msra.mxu0 %v433
    %643 = vmatprep.subr.mxu0 0.0
    %644 = vmatpush1.msra.mxu0 %v434
    %645 = vmatprep.subr.mxu0 0.0
    %646 = vmatpush1.msra.mxu0 %v435
    %647 = vmatprep.mubr.f32.mxu0 %v339
    %648 = vmatmul.mubr.f32.gmra.mrb[0].mxu0 %v338
    %v649 = vpop.f32.mrb[0].mxu0
    %v650 = vadd.f32 %v580, %v649
    %v651 = vpop.f32.mrb[0].mxu0
    %652 = vdwg.mxu0
    %v653 = vlaneseq
    %v654 = vand.u32 %v653, 127
    %vm655 = vcmp.lt.s32.totalorder %v654, 4
    %v656 = vsel %vm655, %v650, -inf
    %657 = vmax.xlane.f32.xlu0 %v656
    %v658 = vpop.xlane.xlu0 %657
    %v659 = vsub.f32 %v656, %v658
    %v660 = vmul.f32 %v659, 1.442695
    %v661 = vpow.pop %v660
    %662 = vadd.xlane.f32.xlu0 %v661
    %v663 = vpop.xlane.xlu0 %662
    %v664 = vrcp.pop %v663
    %v665 = vmul.f32 %v661, %v664
    %v666 = vmin.f32 %v650, 20.0
    %vm667 = vcmp.gt.f32.partialorder %v650, 20.0
    %v668 = vmul.f32 %v666, 1.442695
    %v669 = vpow.pop %v668
    %v670 = vadd.f32 %v669, 1.0
    %v671 = vlog2.pop %v670
    %v672 = vmul.f32 %v671, 0.6931472
    %v673 = vmul.f32 -0.5, %v669
    %v674 = vadd.f32 %v673, 1.0
    %v675 = vmul.f32 %v674, %v669
    %v676 = vand.u32 2147483647, %v669
    %vm677 = vcmp.lt.f32.partialorder %v676, 0.0004427343
    %v678 = vsel %vm677, %v675, %v672
    %v679 = vsel %vm667, %v650, %v678
    %v680 = vmin.f32 %v650, 0.5
    %vm681 = vcmp.gt.f32.partialorder %v650, 0.5
    %v682 = vmul.f32 %v680, 1.442695
    %v683 = vpow.pop %v682
    %v684 = vadd.f32 %v683, 1.0
    %v685 = vlog2.pop %v684
    %v686 = vmul.f32 %v685, 0.6931472
    %v687 = vmul.f32 -0.5, %v683
    %v688 = vadd.f32 %v687, 1.0
    %v689 = vmul.f32 %v688, %v683
    %v690 = vand.u32 2147483647, %v683
    %vm691 = vcmp.lt.f32.partialorder %v690, 0.0004427343
    %v692 = vsel %vm691, %v689, %v686
    %v693 = vsel %vm681, %v650, %v692
    %vm694 = vcmp.lt.s32.totalorder %v654, 12
    %vm695 = vcmp.lt.s32.totalorder %v654, 20
    %v696 = vsel %vm695, %v693, 0.0
    %v697 = vsel %vm694, %v679, %v696
    %v698 = vsel %vm655, %v665, %v697
    %699 = vst [vmem:[#allocation8] sm:$0xff] %v698
    // Predicated region
    $region34: #{tpu_custom_call.1} parent=1 // pred_check
      _
    $region35: #{tpu_custom_call.1} parent=1 // pred_check_branch
      %701 = sbr.rel (0) target = $region37
    $region36: #{tpu_custom_call.1} parent=1 // pred_region
      %s703 = ssub.s32 128, 128
      %704 = vsyncadd [#allocation4], %s703
      %s706 = sshll.u32 [#allocation8], 4
      %s707 = int_to_ptr.vmem [resolvable:$true] %s706
      %709 = dma.vmem_to_hbm [thread:$0]  %s707, 128, %s5, [#allocation4]
    $region37: #{tpu_custom_call.1} parent=1 // pred_fallthru
      _
    // Predicated region
    $region38: #{tpu_custom_call.1} parent=1 // pred_check
      _
    $region39: #{tpu_custom_call.1} parent=1 // pred_check_branch
      %711 = sbr.rel (0) target = $region41
    $region40: #{tpu_custom_call.1} parent=1 // pred_region
      %712 = dma.done [#allocation4], 128
    $region41: #{tpu_custom_call.1} parent=1 // pred_fallthru
      _
    %713 = vsyncpa [#allocation3], 1
    %714 = vsyncpa [#allocation6], 1
    %715 = vsyncpa [#allocation4], 1

</llo_original>
